<compile_context>
chip_gen: v7x
topology: tpu7x:2x2x1
jax: 0.10.0
libtpu: 0.0.40
codegen_flags: <defaults>
</compile_context>

<pallas_src>
import jax
import jax.numpy as jnp
from jax.experimental import pallas as pl
from jax.experimental.pallas import tpu as pltpu

LANE_PAD = 128  # pad hidden / output feature dims to one full lane width


def mlp_kernel(x_ref, w1_ref, b1_ref, w2_ref, b2_ref, w3_ref, b3_ref, o_ref):
    # Hoist bias loads (read once per tile).
    b1 = b1_ref[...]
    b2 = b2_ref[...]
    b3 = b3_ref[...]

    x = x_ref[...]
    # Layer 1: Linear(num_inputs, 30 -> padded 128) + ReLU
    h1 = jnp.maximum(
        jnp.dot(x, w1_ref[...], preferred_element_type=jnp.float32) + b1, 0.0
    )
    # Layer 2: Linear(30, 20 -> padded 128) + ReLU
    h2 = jnp.maximum(
        jnp.dot(h1, w2_ref[...], preferred_element_type=jnp.float32) + b2, 0.0
    )
    # Layer 3: Linear(20, num_outputs -> padded 128), logits (no activation)
    o_ref[...] = (
        jnp.dot(h2, w3_ref[...], preferred_element_type=jnp.float32) + b3
    ).astype(o_ref.dtype)


def _pad_last(a, target):
    pad = target - a.shape[-1]
    return jnp.pad(a, [(0, 0)] * (a.ndim - 1) + [(0, pad)])


def _pad_first(a, target):
    pad = target - a.shape[0]
    return jnp.pad(a, [(0, pad)] + [(0, 0)] * (a.ndim - 1))


def mlp_forward(x, w1, b1, w2, b2, w3, b3, *, tile_b=512):
    batch, num_inputs = x.shape
    num_outputs = w3.shape[1]

    # --- Zero-pad feature dims to 128 (lane-dense matmuls & stores). ---
    # Padded output columns of each layer get zero weights + zero bias, so they
    # stay exactly zero through ReLU and contribute nothing downstream.
    w1p = _pad_last(w1, LANE_PAD)                       # (num_inputs, 128)
    b1p = _pad_last(b1, LANE_PAD)                       # (1, 128)
    w2p = _pad_last(_pad_first(w2, LANE_PAD), LANE_PAD)  # (128, 128)
    b2p = _pad_last(b2, LANE_PAD)                       # (1, 128)
    w3p = _pad_last(_pad_first(w3, LANE_PAD), LANE_PAD)  # (128, 128)
    b3p = _pad_last(b3, LANE_PAD)                       # (1, 128)

    # --- Batch tiling: multiple of 8 (f32 sublane), up to 512 rows per step.
    # A 512x32 f32 x tile + 512x128 f32 out tile is ~320 KiB, so even
    # double-buffered this is far under v7x's 64 MiB VMEM.
    tile_b = max(8, min(tile_b, pl.cdiv(batch, 8) * 8))
    padded_batch = pl.cdiv(batch, tile_b) * tile_b
    xp = jnp.pad(x, ((0, padded_batch - batch), (0, 0)))
    grid = (padded_batch // tile_b,)

    def resident(a):
        # Same block every grid step -> stays pinned in VMEM, no re-DMA.
        return pl.BlockSpec(a.shape, lambda i: (0, 0))

    out = pl.pallas_call(
        mlp_kernel,
        out_shape=jax.ShapeDtypeStruct((padded_batch, LANE_PAD), jnp.float32),
        grid=grid,
        in_specs=[
            pl.BlockSpec((tile_b, num_inputs), lambda i: (i, 0)),  # x: tiled over batch
            resident(w1p), resident(b1p),
            resident(w2p), resident(b2p),
            resident(w3p), resident(b3p),
        ],
        out_specs=pl.BlockSpec((tile_b, LANE_PAD), lambda i: (i, 0)),
        compiler_params=pltpu.CompilerParams(
            dimension_semantics=("parallel",),  # batch axis split across TCs on v7x
        ),
    )(xp, w1p, b1p, w2p, b2p, w3p, b3p)

    # Slice away batch padding and padded feature columns.
    return out[:batch, :num_outputs]


def init_params(key, num_inputs, num_outputs):
    """Deterministic init mimicking torch.nn.Linear (uniform(-1/sqrt(fan_in), +))."""
    dims = [(num_inputs, 30), (30, 20), (20, num_outputs)]
    params = []
    for fan_in, fan_out in dims:
        key, kw, kb = jax.random.split(key, 3)
        bound = 1.0 / (fan_in ** 0.5)
        w = jax.random.uniform(kw, (fan_in, fan_out), jnp.float32, -bound, bound)
        b = jax.random.uniform(kb, (1, fan_out), jnp.float32, -bound, bound)
        params.extend([w, b])
    return params


if __name__ == "__main__":
    # batch=10 deliberately NOT a multiple of 8 to exercise batch padding/slicing.
    num_inputs, num_outputs, batch = 32, 10, 10

    key = jax.random.PRNGKey(0)
    key, kx = jax.random.split(key)
    x = jax.random.normal(kx, (batch, num_inputs), jnp.float32)
    w1, b1, w2, b2, w3, b3 = init_params(key, num_inputs, num_outputs)

    logits = mlp_forward(x, w1, b1, w2, b2, w3, b3)
    jax.block_until_ready(logits)

    # Pure-JAX reference check (unpadded math).
    h = jnp.maximum(x @ w1 + b1, 0.0)
    h = jnp.maximum(h @ w2 + b2, 0.0)
    ref = h @ w3 + b3
    assert logits.shape == (batch, num_outputs)
    assert jnp.allclose(logits, ref, atol=1e-5, rtol=1e-5)

    print("KERNEL_OK")
</pallas_src>

<mosaic_0001>
module attributes {stable_mosaic.version = 11 : i64} {
  func.func @mlp_kernel(%arg0: i32, %arg1: memref<16x32xf32, #tpu.memory_space<vmem>>, %arg2: memref<32x128xf32, #tpu.memory_space<vmem>>, %arg3: memref<1x128xf32, #tpu.memory_space<vmem>>, %arg4: memref<128x128xf32, #tpu.memory_space<vmem>>, %arg5: memref<1x128xf32, #tpu.memory_space<vmem>>, %arg6: memref<128x128xf32, #tpu.memory_space<vmem>>, %arg7: memref<1x128xf32, #tpu.memory_space<vmem>>, %arg8: memref<16x128xf32, #tpu.memory_space<vmem>>) attributes {dimension_semantics = [#tpu.dimension_semantics<parallel>], iteration_bounds = array<i64: 1>, scalar_prefetch = 0 : i64, scratch_operands = 0 : i64, tpu.core_type = #tpu.core_type<tc>, window_params = [{transform_indices = @transform_0, window_bounds = array<i64: 16, 32>}, {pipeline_mode = #tpu.pipeline_mode<synchronous>, transform_indices = @transform_1, window_bounds = array<i64: 32, 128>}, {pipeline_mode = #tpu.pipeline_mode<synchronous>, transform_indices = @transform_2, window_bounds = array<i64: 1, 128>}, {pipeline_mode = #tpu.pipeline_mode<synchronous>, transform_indices = @transform_3, window_bounds = array<i64: 128, 128>}, {pipeline_mode = #tpu.pipeline_mode<synchronous>, transform_indices = @transform_4, window_bounds = array<i64: 1, 128>}, {pipeline_mode = #tpu.pipeline_mode<synchronous>, transform_indices = @transform_5, window_bounds = array<i64: 128, 128>}, {pipeline_mode = #tpu.pipeline_mode<synchronous>, transform_indices = @transform_6, window_bounds = array<i64: 1, 128>}, {transform_indices = @transform_7, window_bounds = array<i64: 16, 128>}]} {
    %c0 = arith.constant 0 : index
    %c0_0 = arith.constant 0 : index
    %0 = vector.load %arg3[%c0, %c0_0] : memref<1x128xf32, #tpu.memory_space<vmem>>, vector<1x128xf32>
    %c0_1 = arith.constant 0 : index
    %c0_2 = arith.constant 0 : index
    %1 = vector.load %arg5[%c0_1, %c0_2] : memref<1x128xf32, #tpu.memory_space<vmem>>, vector<1x128xf32>
    %c0_3 = arith.constant 0 : index
    %c0_4 = arith.constant 0 : index
    %2 = vector.load %arg7[%c0_3, %c0_4] : memref<1x128xf32, #tpu.memory_space<vmem>>, vector<1x128xf32>
    %c0_5 = arith.constant 0 : index
    %c0_6 = arith.constant 0 : index
    %3 = vector.load %arg1[%c0_5, %c0_6] : memref<16x32xf32, #tpu.memory_space<vmem>>, vector<16x32xf32>
    %c0_7 = arith.constant 0 : index
    %c0_8 = arith.constant 0 : index
    %4 = vector.load %arg2[%c0_7, %c0_8] : memref<32x128xf32, #tpu.memory_space<vmem>>, vector<32x128xf32>
    %cst = arith.constant dense<0.000000e+00> : vector<16x128xf32>
    %5 = tpu.matmul %3, %4, %cst {dimension_numbers = #tpu.dot_dimension_numbers<[1], [0], [0], [1], [0, 0, 1, 1], [], []>} : vector<16x32xf32>, vector<32x128xf32>, vector<16x128xf32> -> vector<16x128xf32>
    %6 = vector.broadcast %0 : vector<1x128xf32> to vector<16x128xf32>
    %7 = arith.addf %5, %6 : vector<16x128xf32>
    %cst_9 = arith.constant 0.000000e+00 : f32
    %8 = vector.broadcast %cst_9 : f32 to vector<16x128xf32>
    %9 = arith.maximumf %7, %8 : vector<16x128xf32>
    %c0_10 = arith.constant 0 : index
    %c0_11 = arith.constant 0 : index
    %10 = vector.load %arg4[%c0_10, %c0_11] : memref<128x128xf32, #tpu.memory_space<vmem>>, vector<128x128xf32>
    %cst_12 = arith.constant dense<0.000000e+00> : vector<16x128xf32>
    %11 = tpu.matmul %9, %10, %cst_12 {dimension_numbers = #tpu.dot_dimension_numbers<[1], [0], [0], [1], [0, 0, 1, 1], [], []>} : vector<16x128xf32>, vector<128x128xf32>, vector<16x128xf32> -> vector<16x128xf32>
    %12 = vector.broadcast %1 : vector<1x128xf32> to vector<16x128xf32>
    %13 = arith.addf %11, %12 : vector<16x128xf32>
    %cst_13 = arith.constant 0.000000e+00 : f32
    %14 = vector.broadcast %cst_13 : f32 to vector<16x128xf32>
    %15 = arith.maximumf %13, %14 : vector<16x128xf32>
    %c0_14 = arith.constant 0 : index
    %c0_15 = arith.constant 0 : index
    %16 = vector.load %arg6[%c0_14, %c0_15] : memref<128x128xf32, #tpu.memory_space<vmem>>, vector<128x128xf32>
    %cst_16 = arith.constant dense<0.000000e+00> : vector<16x128xf32>
    %17 = tpu.matmul %15, %16, %cst_16 {dimension_numbers = #tpu.dot_dimension_numbers<[1], [0], [0], [1], [0, 0, 1, 1], [], []>} : vector<16x128xf32>, vector<128x128xf32>, vector<16x128xf32> -> vector<16x128xf32>
    %18 = vector.broadcast %2 : vector<1x128xf32> to vector<16x128xf32>
    %19 = arith.addf %17, %18 : vector<16x128xf32>
    %c0_17 = arith.constant 0 : index
    %c0_18 = arith.constant 0 : index
    %20 = vector.load %arg8[%c0_17, %c0_18] : memref<16x128xf32, #tpu.memory_space<vmem>>, vector<16x128xf32>
    tpu.vector_store %arg8[%c0_17, %c0_18], %19 {strides = array<i32>} : memref<16x128xf32, #tpu.memory_space<vmem>>, vector<16x128xf32>,
    return
  }
  func.func @transform_0(%arg0: i32) -> (i32, i32) {
    %c0_i32 = arith.constant 0 : i32
    %c0_i32_0 = arith.constant 0 : i32
    return %arg0, %c0_i32 : i32, i32
  }
  func.func @transform_1(%arg0: i32) -> (i32, i32) {
    %c0_i32 = arith.constant 0 : i32
    %c0_i32_0 = arith.constant 0 : i32
    %c0_i32_1 = arith.constant 0 : i32
    return %c0_i32, %c0_i32_0 : i32, i32
  }
  func.func @transform_2(%arg0: i32) -> (i32, i32) {
    %c0_i32 = arith.constant 0 : i32
    %c0_i32_0 = arith.constant 0 : i32
    %c0_i32_1 = arith.constant 0 : i32
    return %c0_i32, %c0_i32_0 : i32, i32
  }
  func.func @transform_3(%arg0: i32) -> (i32, i32) {
    %c0_i32 = arith.constant 0 : i32
    %c0_i32_0 = arith.constant 0 : i32
    %c0_i32_1 = arith.constant 0 : i32
    return %c0_i32, %c0_i32_0 : i32, i32
  }
  func.func @transform_4(%arg0: i32) -> (i32, i32) {
    %c0_i32 = arith.constant 0 : i32
    %c0_i32_0 = arith.constant 0 : i32
    %c0_i32_1 = arith.constant 0 : i32
    return %c0_i32, %c0_i32_0 : i32, i32
  }
  func.func @transform_5(%arg0: i32) -> (i32, i32) {
    %c0_i32 = arith.constant 0 : i32
    %c0_i32_0 = arith.constant 0 : i32
    %c0_i32_1 = arith.constant 0 : i32
    return %c0_i32, %c0_i32_0 : i32, i32
  }
  func.func @transform_6(%arg0: i32) -> (i32, i32) {
    %c0_i32 = arith.constant 0 : i32
    %c0_i32_0 = arith.constant 0 : i32
    %c0_i32_1 = arith.constant 0 : i32
    return %c0_i32, %c0_i32_0 : i32, i32
  }
  func.func @transform_7(%arg0: i32) -> (i32, i32) {
    %c0_i32 = arith.constant 0 : i32
    %c0_i32_0 = arith.constant 0 : i32
    return %arg0, %c0_i32 : i32, i32
  }
}

</mosaic_0001>

<llo_original>
// kernel: tpu_custom_call.1
$region0: #{tpu_custom_call.1}
  #allocation0 [shape = 'u32[]', space=smem, size = 0x4, offset = 0x4, fixed_abs, tag = 'smem constant byte address 0x4 - core index']
  #allocation1 [shape = 'u32[144,128]{1,0:T(1,128)}', space=vmem, size = 0x12000, scoped, tag = 'internal scratch']
  %s0 = inlined_call_operand.hbm [shape: f32[16,32], index: 0, kind: input, shape index: {}]
  %s1 = inlined_call_operand.hbm [shape: f32[32,128], index: 1, kind: input, shape index: {}]
  %s2 = inlined_call_operand.vmem [shape: f32[1,128], index: 2, kind: input, shape index: {}]
  %s3 = inlined_call_operand.hbm [shape: f32[128,128], index: 3, kind: input, shape index: {}]
  %s4 = inlined_call_operand.vmem [shape: f32[1,128], index: 4, kind: input, shape index: {}]
  %s5 = inlined_call_operand.hbm [shape: f32[128,128], index: 5, kind: input, shape index: {}]
  %s6 = inlined_call_operand.vmem [shape: f32[1,128], index: 6, kind: input, shape index: {}]
  %s7 = inlined_call_operand.hbm [shape: f32[16,128], index: 7, kind: output, shape index: {}]
  %s8 = sld [smem:[#allocation0]]
  $region54: #{tpu_custom_call.1} parent=0
    _
  %s10 = ssub.s32 1, %s8
  %s11 = scalar_select 0, %s10, %s8
  $region1: #{tpu_custom_call.1} parent=0
    #allocation2 [shape = 'u8[8192]{0}', space=vmem, size = 0x2000, scoped, tag = 'input window, operand 0, single buffered']
    #allocation3 [shape = 's32[1]{0}', space=sflag, size = 0x4, scoped, tag = 'scoped memory for tpu_custom_call.1']
    #allocation4 [shape = 's32[1]{0}', space=sflag, size = 0x4, scoped, tag = 'scoped memory for tpu_custom_call.1']
    #allocation5 [shape = 'u8[16384]{0}', space=vmem, size = 0x4000, scoped, tag = 'input window, operand 1, single buffered']
    #allocation6 [shape = 's32[1]{0}', space=sflag, size = 0x4, scoped, tag = 'scoped memory for tpu_custom_call.1']
    #allocation7 [shape = 'u8[65536]{0}', space=vmem, size = 0x10000, scoped, tag = 'input window, operand 3, single buffered']
    #allocation8 [shape = 'u8[65536]{0}', space=vmem, size = 0x10000, scoped, tag = 'input window, operand 5, single buffered']
    #allocation9 [shape = 's32[1]{0}', space=sflag, size = 0x4, scoped, tag = 'scoped memory for tpu_custom_call.1']
    #allocation10 [shape = 'u8[8192]{0}', space=vmem, size = 0x2000, scoped, tag = 'output window, operand 0, single buffered']
    %12 = vsyncpa [#allocation3], 0
    %13 = vsyncpa [#allocation6], 0
    %14 = vsyncpa [#allocation9], 0
    %15 = vsyncpa [#allocation4], 0
    // Predicated region
    $region2: #{tpu_custom_call.1} parent=1 // pred_check
      _
    $region3: #{tpu_custom_call.1} parent=1 // pred_check_branch
      %17 = sbr.rel (0) target = $region5
    $region4: #{tpu_custom_call.1} parent=1 // pred_region
      %s19 = ssub.s32 256, 256
      %20 = vsyncadd [#allocation3], %s19
      %s21 = sshll.u32 [#allocation2], 4
      %s22 = int_to_ptr.vmem [resolvable:$true] %s21
      %27 = dma.hbm_to_vmem [thread:$0]  %s0, 256, %s22, [#allocation3], 128, 128, 8
    $region5: #{tpu_custom_call.1} parent=1 // pred_fallthru
      _
    // Predicated region
    $region6: #{tpu_custom_call.1} parent=1 // pred_check
      _
    $region7: #{tpu_custom_call.1} parent=1 // pred_check_branch
      %29 = sbr.rel (0) target = $region9
    $region8: #{tpu_custom_call.1} parent=1 // pred_region
      %s31 = ssub.s32 512, 512
      %32 = vsyncadd [#allocation6], %s31
      %s33 = sshll.u32 [#allocation5], 4
      %s34 = int_to_ptr.vmem [resolvable:$true] %s33
      %39 = dma.hbm_to_vmem [thread:$0]  %s1, 512, %s34, [#allocation6], 128, 128, 8
    $region9: #{tpu_custom_call.1} parent=1 // pred_fallthru
      _
    // Predicated region
    $region10: #{tpu_custom_call.1} parent=1 // pred_check
      _
    $region11: #{tpu_custom_call.1} parent=1 // pred_check_branch
      %41 = sbr.rel (0) target = $region13
    $region12: #{tpu_custom_call.1} parent=1 // pred_region
      _
    $region13: #{tpu_custom_call.1} parent=1 // pred_fallthru
      _
    // Predicated region
    $region14: #{tpu_custom_call.1} parent=1 // pred_check
      _
    $region15: #{tpu_custom_call.1} parent=1 // pred_check_branch
      %43 = sbr.rel (0) target = $region17
    $region16: #{tpu_custom_call.1} parent=1 // pred_region
      %s45 = ssub.s32 2048, 2048
      %46 = vsyncadd [#allocation6], %s45
      %s47 = sshll.u32 [#allocation7], 4
      %s48 = int_to_ptr.vmem [resolvable:$true] %s47
      %53 = dma.hbm_to_vmem [thread:$0]  %s3, 2048, %s48, [#allocation6], 128, 128, 8
    $region17: #{tpu_custom_call.1} parent=1 // pred_fallthru
      _
    // Predicated region
    $region18: #{tpu_custom_call.1} parent=1 // pred_check
      _
    $region19: #{tpu_custom_call.1} parent=1 // pred_check_branch
      %55 = sbr.rel (0) target = $region21
    $region20: #{tpu_custom_call.1} parent=1 // pred_region
      _
    $region21: #{tpu_custom_call.1} parent=1 // pred_fallthru
      _
    // Predicated region
    $region22: #{tpu_custom_call.1} parent=1 // pred_check
      _
    $region23: #{tpu_custom_call.1} parent=1 // pred_check_branch
      %57 = sbr.rel (0) target = $region25
    $region24: #{tpu_custom_call.1} parent=1 // pred_region
      %s59 = ssub.s32 2048, 2048
      %60 = vsyncadd [#allocation9], %s59
      %s61 = sshll.u32 [#allocation8], 4
      %s62 = int_to_ptr.vmem [resolvable:$true] %s61
      %67 = dma.hbm_to_vmem [thread:$0]  %s5, 2048, %s62, [#allocation9], 128, 128, 8
    $region25: #{tpu_custom_call.1} parent=1 // pred_fallthru
      _
    // Predicated region
    $region26: #{tpu_custom_call.1} parent=1 // pred_check
      _
    $region27: #{tpu_custom_call.1} parent=1 // pred_check_branch
      %69 = sbr.rel (0) target = $region29
    $region28: #{tpu_custom_call.1} parent=1 // pred_region
      _
    $region29: #{tpu_custom_call.1} parent=1 // pred_fallthru
      _
    // Predicated region
    $region30: #{tpu_custom_call.1} parent=1 // pred_check
      _
    $region31: #{tpu_custom_call.1} parent=1 // pred_check_branch
      %71 = sbr.rel (0) target = $region33
    $region32: #{tpu_custom_call.1} parent=1 // pred_region
      %72 = dma.done [#allocation3], 256
    $region33: #{tpu_custom_call.1} parent=1 // pred_fallthru
      _
    // Predicated region
    $region34: #{tpu_custom_call.1} parent=1 // pred_check
      _
    $region35: #{tpu_custom_call.1} parent=1 // pred_check_branch
      %74 = sbr.rel (0) target = $region37
    $region36: #{tpu_custom_call.1} parent=1 // pred_region
      %75 = dma.done [#allocation6], 512
    $region37: #{tpu_custom_call.1} parent=1 // pred_fallthru
      _
    // Predicated region
    $region38: #{tpu_custom_call.1} parent=1 // pred_check
      _
    $region39: #{tpu_custom_call.1} parent=1 // pred_check_branch
      %77 = sbr.rel (0) target = $region41
    $region40: #{tpu_custom_call.1} parent=1 // pred_region
      %78 = dma.done [#allocation6], 2048
    $region41: #{tpu_custom_call.1} parent=1 // pred_fallthru
      _
    // Predicated region
    $region42: #{tpu_custom_call.1} parent=1 // pred_check
      _
    $region43: #{tpu_custom_call.1} parent=1 // pred_check_branch
      %80 = sbr.rel (0) target = $region45
    $region44: #{tpu_custom_call.1} parent=1 // pred_region
      %81 = dma.done [#allocation9], 2048
    $region45: #{tpu_custom_call.1} parent=1 // pred_fallthru
      _
    %v82 = vld [vmem:[%s2] sm:$0x1]
    %v83 = vld [vmem:[%s4] sm:$0x1]
    %v84 = vld [vmem:[%s6] sm:$0x1]
    %v85 = vld [vmem:[#allocation2] sm:$0xff]
    %v86 = vld [vmem:[#allocation2 + $0x8] sm:$0xff]
    %v87 = vld [vmem:[#allocation5] sm:$0xff]
    %v88 = vld [vmem:[#allocation5 + $0x8] sm:$0xff]
    %v89 = vld [vmem:[#allocation5 + $0x10] sm:$0xff]
    %v90 = vld [vmem:[#allocation5 + $0x18] sm:$0xff]
    %v92 = vlaneseq
    %v93 = vshrl.u32 %v92, 7
    %v94 = vsub.s32 0, %v93
    %v95 = vrot.slane %v82, %v94
    %vm97 = vcmask 261120
    %v99 = vsel %vm97, %v85, 0
    %v102 = vsel %vm97, %v86, 0
    %104 = vmatprep.subr.mxu0 0.0
    %105 = vmatpush1.msra.mxu0 %v87
    %106 = vmatprep.subr.mxu0 0.0
    %107 = vmatpush1.msra.mxu0 %v88
    %108 = vmatprep.subr.mxu0 0.0
    %109 = vmatpush1.msra.mxu0 %v89
    %110 = vmatprep.subr.mxu0 0.0
    %111 = vmatpush1.msra.mxu0 %v90
    %112 = vmatprep.subr.mxu0 0.0
    %113 = vmatpush1.msra.mxu0 0.0
    %114 = vmatprep.subr.mxu0 0.0
    %115 = vmatpush1.msra.mxu0 0.0
    %116 = vmatprep.subr.mxu0 0.0
    %117 = vmatpush1.msra.mxu0 0.0
    %118 = vmatprep.subr.mxu0 0.0
    %119 = vmatpush1.msra.mxu0 0.0
    %120 = vmatprep.subr.mxu0 0.0
    %121 = vmatpush1.msra.mxu0 0.0
    %122 = vmatprep.subr.mxu0 0.0
    %123 = vmatpush1.msra.mxu0 0.0
    %124 = vmatprep.subr.mxu0 0.0
    %125 = vmatpush1.msra.mxu0 0.0
    %126 = vmatprep.subr.mxu0 0.0
    %127 = vmatpush1.msra.mxu0 0.0
    %128 = vmatprep.subr.mxu0 0.0
    %129 = vmatpush1.msra.mxu0 0.0
    %130 = vmatprep.subr.mxu0 0.0
    %131 = vmatpush1.msra.mxu0 0.0
    %132 = vmatprep.subr.mxu0 0.0
    %133 = vmatpush1.msra.mxu0 0.0
    %134 = vmatprep.subr.mxu0 0.0
    %135 = vmatpush1.msra.mxu0 0.0
    %136 = vmatprep.subr.mxu0 0.0
    %137 = vmatpush1.msra.mxu0 0.0
    %138 = vmatprep.subr.mxu0 0.0
    %139 = vmatpush1.msra.mxu0 0.0
    %140 = vmatprep.subr.mxu0 0.0
    %141 = vmatpush1.msra.mxu0 0.0
    %142 = vmatprep.subr.mxu0 0.0
    %143 = vmatpush1.msra.mxu0 0.0
    %144 = vmatprep.subr.mxu0 0.0
    %145 = vmatpush1.msra.mxu0 0.0
    %146 = vmatprep.subr.mxu0 0.0
    %147 = vmatpush1.msra.mxu0 0.0
    %148 = vmatprep.subr.mxu0 0.0
    %149 = vmatpush1.msra.mxu0 0.0
    %150 = vmatprep.subr.mxu0 0.0
    %151 = vmatpush1.msra.mxu0 0.0
    %152 = vmatprep.subr.mxu0 0.0
    %153 = vmatpush1.msra.mxu0 0.0
    %154 = vmatprep.subr.mxu0 0.0
    %155 = vmatpush1.msra.mxu0 0.0
    %156 = vmatprep.subr.mxu0 0.0
    %157 = vmatpush1.msra.mxu0 0.0
    %158 = vmatprep.subr.mxu0 0.0
    %159 = vmatpush1.msra.mxu0 0.0
    %160 = vmatprep.subr.mxu0 0.0
    %161 = vmatpush1.msra.mxu0 0.0
    %162 = vmatprep.subr.mxu0 0.0
    %163 = vmatpush1.msra.mxu0 0.0
    %164 = vmatprep.subr.mxu0 0.0
    %165 = vmatpush1.msra.mxu0 0.0
    %166 = vmatprep.subr.mxu0 0.0
    %167 = vmatpush1.msra.mxu0 0.0
    %168 = vmatprep.mubr.f32.mxu0 0.0
    %169 = vmatmul.mubr.f32.gmra.mrb[0].mxu0 %v99
    %v170 = vpop.f32.mrb[0].mxu0
    %v171 = vadd.f32 %v95, %v170
    %v172 = vpop.f32.mrb[0].mxu0
    %173 = vmatprep.mubr.f32.mxu0 0.0
    %174 = vmatmul.mubr.f32.gmra.mrb[0].mxu0 %v102
    %v175 = vpop.f32.mrb[0].mxu0
    %v176 = vadd.f32 %v95, %v175
    %v177 = vpop.f32.mrb[0].mxu0
    %178 = vdwg.mxu0
    %v179 = vmax.f32 %v171, 0.0
    %v180 = vmax.f32 %v176, 0.0
    %v181 = vld [vmem:[#allocation7] sm:$0xff]
    %v182 = vld [vmem:[#allocation7 + $0x8] sm:$0xff]
    %v183 = vld [vmem:[#allocation7 + $0x10] sm:$0xff]
    %v184 = vld [vmem:[#allocation7 + $0x18] sm:$0xff]
    %v185 = vld [vmem:[#allocation7 + $0x20] sm:$0xff]
    %v186 = vld [vmem:[#allocation7 + $0x28] sm:$0xff]
    %v187 = vld [vmem:[#allocation7 + $0x30] sm:$0xff]
    %v188 = vld [vmem:[#allocation7 + $0x38] sm:$0xff]
    %v189 = vld [vmem:[#allocation7 + $0x40] sm:$0xff]
    %v190 = vld [vmem:[#allocation7 + $0x48] sm:$0xff]
    %v191 = vld [vmem:[#allocation7 + $0x50] sm:$0xff]
    %v192 = vld [vmem:[#allocation7 + $0x58] sm:$0xff]
    %v193 = vld [vmem:[#allocation7 + $0x60] sm:$0xff]
    %v194 = vld [vmem:[#allocation7 + $0x68] sm:$0xff]
    %v195 = vld [vmem:[#allocation7 + $0x70] sm:$0xff]
    %v196 = vld [vmem:[#allocation7 + $0x78] sm:$0xff]
    %v198 = vlaneseq
    %v199 = vshrl.u32 %v198, 7
    %v200 = vsub.s32 0, %v199
    %v201 = vrot.slane %v83, %v200
    %203 = vmatprep.subr.mxu0 0.0
    %204 = vmatpush1.msra.mxu0 %v181
    %205 = vmatprep.subr.mxu0 0.0
    %206 = vmatpush1.msra.mxu0 %v182
    %207 = vmatprep.subr.mxu0 0.0
    %208 = vmatpush1.msra.mxu0 %v183
    %209 = vmatprep.subr.mxu0 0.0
    %210 = vmatpush1.msra.mxu0 %v184
    %211 = vmatprep.subr.mxu0 0.0
    %212 = vmatpush1.msra.mxu0 %v185
    %213 = vmatprep.subr.mxu0 0.0
    %214 = vmatpush1.msra.mxu0 %v186
    %215 = vmatprep.subr.mxu0 0.0
    %216 = vmatpush1.msra.mxu0 %v187
    %217 = vmatprep.subr.mxu0 0.0
    %218 = vmatpush1.msra.mxu0 %v188
    %219 = vmatprep.subr.mxu0 0.0
    %220 = vmatpush1.msra.mxu0 %v189
    %221 = vmatprep.subr.mxu0 0.0
    %222 = vmatpush1.msra.mxu0 %v190
    %223 = vmatprep.subr.mxu0 0.0
    %224 = vmatpush1.msra.mxu0 %v191
    %225 = vmatprep.subr.mxu0 0.0
    %226 = vmatpush1.msra.mxu0 %v192
    %227 = vmatprep.subr.mxu0 0.0
    %228 = vmatpush1.msra.mxu0 %v193
    %229 = vmatprep.subr.mxu0 0.0
    %230 = vmatpush1.msra.mxu0 %v194
    %231 = vmatprep.subr.mxu0 0.0
    %232 = vmatpush1.msra.mxu0 %v195
    %233 = vmatprep.subr.mxu0 0.0
    %234 = vmatpush1.msra.mxu0 %v196
    %235 = vmatprep.subr.mxu0 0.0
    %236 = vmatpush1.msra.mxu0 0.0
    %237 = vmatprep.subr.mxu0 0.0
    %238 = vmatpush1.msra.mxu0 0.0
    %239 = vmatprep.subr.mxu0 0.0
    %240 = vmatpush1.msra.mxu0 0.0
    %241 = vmatprep.subr.mxu0 0.0
    %242 = vmatpush1.msra.mxu0 0.0
    %243 = vmatprep.subr.mxu0 0.0
    %244 = vmatpush1.msra.mxu0 0.0
    %245 = vmatprep.subr.mxu0 0.0
    %246 = vmatpush1.msra.mxu0 0.0
    %247 = vmatprep.subr.mxu0 0.0
    %248 = vmatpush1.msra.mxu0 0.0
    %249 = vmatprep.subr.mxu0 0.0
    %250 = vmatpush1.msra.mxu0 0.0
    %251 = vmatprep.subr.mxu0 0.0
    %252 = vmatpush1.msra.mxu0 0.0
    %253 = vmatprep.subr.mxu0 0.0
    %254 = vmatpush1.msra.mxu0 0.0
    %255 = vmatprep.subr.mxu0 0.0
    %256 = vmatpush1.msra.mxu0 0.0
    %257 = vmatprep.subr.mxu0 0.0
    %258 = vmatpush1.msra.mxu0 0.0
    %259 = vmatprep.subr.mxu0 0.0
    %260 = vmatpush1.msra.mxu0 0.0
    %261 = vmatprep.subr.mxu0 0.0
    %262 = vmatpush1.msra.mxu0 0.0
    %263 = vmatprep.subr.mxu0 0.0
    %264 = vmatpush1.msra.mxu0 0.0
    %265 = vmatprep.subr.mxu0 0.0
    %266 = vmatpush1.msra.mxu0 0.0
    %267 = vmatprep.mubr.f32.mxu0 0.0
    %268 = vmatmul.mubr.f32.gmra.mrb[0].mxu0 %v179
    %v269 = vpop.f32.mrb[0].mxu0
    %v270 = vadd.f32 %v201, %v269
    %v271 = vpop.f32.mrb[0].mxu0
    %272 = vmatprep.mubr.f32.mxu0 0.0
    %273 = vmatmul.mubr.f32.gmra.mrb[0].mxu0 %v180
    %v274 = vpop.f32.mrb[0].mxu0
    %v275 = vadd.f32 %v201, %v274
    %v276 = vpop.f32.mrb[0].mxu0
    %277 = vdwg.mxu0
    %v278 = vmax.f32 %v270, 0.0
    %v279 = vmax.f32 %v275, 0.0
    %v280 = vld [vmem:[#allocation8] sm:$0xff]
    %v281 = vld [vmem:[#allocation8 + $0x8] sm:$0xff]
    %v282 = vld [vmem:[#allocation8 + $0x10] sm:$0xff]
    %v283 = vld [vmem:[#allocation8 + $0x18] sm:$0xff]
    %v284 = vld [vmem:[#allocation8 + $0x20] sm:$0xff]
    %v285 = vld [vmem:[#allocation8 + $0x28] sm:$0xff]
    %v286 = vld [vmem:[#allocation8 + $0x30] sm:$0xff]
    %v287 = vld [vmem:[#allocation8 + $0x38] sm:$0xff]
    %v288 = vld [vmem:[#allocation8 + $0x40] sm:$0xff]
    %v289 = vld [vmem:[#allocation8 + $0x48] sm:$0xff]
    %v290 = vld [vmem:[#allocation8 + $0x50] sm:$0xff]
    %v291 = vld [vmem:[#allocation8 + $0x58] sm:$0xff]
    %v292 = vld [vmem:[#allocation8 + $0x60] sm:$0xff]
    %v293 = vld [vmem:[#allocation8 + $0x68] sm:$0xff]
    %v294 = vld [vmem:[#allocation8 + $0x70] sm:$0xff]
    %v295 = vld [vmem:[#allocation8 + $0x78] sm:$0xff]
    %v297 = vlaneseq
    %v298 = vshrl.u32 %v297, 7
    %v299 = vsub.s32 0, %v298
    %v300 = vrot.slane %v84, %v299
    %302 = vmatprep.subr.mxu0 0.0
    %303 = vmatpush1.msra.mxu0 %v280
    %304 = vmatprep.subr.mxu0 0.0
    %305 = vmatpush1.msra.mxu0 %v281
    %306 = vmatprep.subr.mxu0 0.0
    %307 = vmatpush1.msra.mxu0 %v282
    %308 = vmatprep.subr.mxu0 0.0
    %309 = vmatpush1.msra.mxu0 %v283
    %310 = vmatprep.subr.mxu0 0.0
    %311 = vmatpush1.msra.mxu0 %v284
    %312 = vmatprep.subr.mxu0 0.0
    %313 = vmatpush1.msra.mxu0 %v285
    %314 = vmatprep.subr.mxu0 0.0
    %315 = vmatpush1.msra.mxu0 %v286
    %316 = vmatprep.subr.mxu0 0.0
    %317 = vmatpush1.msra.mxu0 %v287
    %318 = vmatprep.subr.mxu0 0.0
    %319 = vmatpush1.msra.mxu0 %v288
    %320 = vmatprep.subr.mxu0 0.0
    %321 = vmatpush1.msra.mxu0 %v289
    %322 = vmatprep.subr.mxu0 0.0
    %323 = vmatpush1.msra.mxu0 %v290
    %324 = vmatprep.subr.mxu0 0.0
    %325 = vmatpush1.msra.mxu0 %v291
    %326 = vmatprep.subr.mxu0 0.0
    %327 = vmatpush1.msra.mxu0 %v292
    %328 = vmatprep.subr.mxu0 0.0
    %329 = vmatpush1.msra.mxu0 %v293
    %330 = vmatprep.subr.mxu0 0.0
    %331 = vmatpush1.msra.mxu0 %v294
    %332 = vmatprep.subr.mxu0 0.0
    %333 = vmatpush1.msra.mxu0 %v295
    %334 = vmatprep.subr.mxu0 0.0
    %335 = vmatpush1.msra.mxu0 0.0
    %336 = vmatprep.subr.mxu0 0.0
    %337 = vmatpush1.msra.mxu0 0.0
    %338 = vmatprep.subr.mxu0 0.0
    %339 = vmatpush1.msra.mxu0 0.0
    %340 = vmatprep.subr.mxu0 0.0
    %341 = vmatpush1.msra.mxu0 0.0
    %342 = vmatprep.subr.mxu0 0.0
    %343 = vmatpush1.msra.mxu0 0.0
    %344 = vmatprep.subr.mxu0 0.0
    %345 = vmatpush1.msra.mxu0 0.0
    %346 = vmatprep.subr.mxu0 0.0
    %347 = vmatpush1.msra.mxu0 0.0
    %348 = vmatprep.subr.mxu0 0.0
    %349 = vmatpush1.msra.mxu0 0.0
    %350 = vmatprep.subr.mxu0 0.0
    %351 = vmatpush1.msra.mxu0 0.0
    %352 = vmatprep.subr.mxu0 0.0
    %353 = vmatpush1.msra.mxu0 0.0
    %354 = vmatprep.subr.mxu0 0.0
    %355 = vmatpush1.msra.mxu0 0.0
    %356 = vmatprep.subr.mxu0 0.0
    %357 = vmatpush1.msra.mxu0 0.0
    %358 = vmatprep.subr.mxu0 0.0
    %359 = vmatpush1.msra.mxu0 0.0
    %360 = vmatprep.subr.mxu0 0.0
    %361 = vmatpush1.msra.mxu0 0.0
    %362 = vmatprep.subr.mxu0 0.0
    %363 = vmatpush1.msra.mxu0 0.0
    %364 = vmatprep.subr.mxu0 0.0
    %365 = vmatpush1.msra.mxu0 0.0
    %366 = vmatprep.mubr.f32.mxu0 0.0
    %367 = vmatmul.mubr.f32.gmra.mrb[0].mxu0 %v278
    %v368 = vpop.f32.mrb[0].mxu0
    %v369 = vadd.f32 %v300, %v368
    %v370 = vpop.f32.mrb[0].mxu0
    %371 = vmatprep.mubr.f32.mxu0 0.0
    %372 = vmatmul.mubr.f32.gmra.mrb[0].mxu0 %v279
    %v373 = vpop.f32.mrb[0].mxu0
    %v374 = vadd.f32 %v300, %v373
    %v375 = vpop.f32.mrb[0].mxu0
    %376 = vdwg.mxu0
    %377 = vst [vmem:[#allocation10] sm:$0xff] %v369
    %378 = vst [vmem:[#allocation10 + $0x8] sm:$0xff] %v374
    // Predicated region
    $region46: #{tpu_custom_call.1} parent=1 // pred_check
      _
    $region47: #{tpu_custom_call.1} parent=1 // pred_check_branch
      %380 = sbr.rel (0) target = $region49
    $region48: #{tpu_custom_call.1} parent=1 // pred_region
      %s382 = ssub.s32 256, 256
      %383 = vsyncadd [#allocation4], %s382
      %s384 = sshll.u32 [#allocation10], 4
      %s385 = int_to_ptr.vmem [resolvable:$true] %s384
      %390 = dma.vmem_to_hbm [thread:$0]  %s385, 256, %s7, [#allocation4], 128, 128, 8
    $region49: #{tpu_custom_call.1} parent=1 // pred_fallthru
      _
    // Predicated region
    $region50: #{tpu_custom_call.1} parent=1 // pred_check
      _
    $region51: #{tpu_custom_call.1} parent=1 // pred_check_branch
      %392 = sbr.rel (0) target = $region53
    $region52: #{tpu_custom_call.1} parent=1 // pred_region
      %393 = dma.done [#allocation4], 256
    $region53: #{tpu_custom_call.1} parent=1 // pred_fallthru
      _
    %394 = vsyncpa [#allocation3], 1
    %395 = vsyncpa [#allocation6], 1
    %396 = vsyncpa [#allocation9], 1
    %397 = vsyncpa [#allocation4], 1

</llo_original>
